<compile_context>
chip_gen: v5e
topology: v5e:2x2
jax: 0.10.0
libtpu: 0.0.40
codegen_flags: <defaults>
</compile_context>

<pallas_src>
import functools
import math

import jax
import jax.numpy as jnp
from jax.experimental import pallas as pl
from jax.experimental.pallas import tpu as pltpu


# ------------------------------ kernels ------------------------------------
def _rmsnorm_kernel(x_ref, o_ref, *, eps, inv_d, use_mxu_reduce):
    x = x_ref[...].astype(jnp.float32)
    xsq = x * x
    if use_mxu_reduce:
        # v7x: one MXU push per vreg instead of ~7 XLU pushes per 128-lane
        # reduce; keeps the extended slot from binding at 3.2 TB/s.
        ones = jnp.ones((x.shape[-1], 1), dtype=jnp.float32)
        ss = jnp.dot(xsq, ones, preferred_element_type=jnp.float32)
    else:
        ss = jnp.sum(xsq, axis=-1, keepdims=True)          # XLU lane reduce
    inv = jax.lax.rsqrt(ss * inv_d + eps)                   # EUP (free slot)
    o_ref[...] = (x * inv).astype(o_ref.dtype)


def _rmsnorm_affine_kernel(x_ref, w_ref, o_ref, *, eps, inv_d, use_mxu_reduce):
    x = x_ref[...].astype(jnp.float32)
    xsq = x * x
    if use_mxu_reduce:
        ones = jnp.ones((x.shape[-1], 1), dtype=jnp.float32)
        ss = jnp.dot(xsq, ones, preferred_element_type=jnp.float32)
    else:
        ss = jnp.sum(xsq, axis=-1, keepdims=True)
    inv = jax.lax.rsqrt(ss * inv_d + eps)
    w = w_ref[...].astype(jnp.float32)                       # (1, Dp) broadcast
    o_ref[...] = (x * inv * w).astype(o_ref.dtype)


# ----------------------------- chip / tiling --------------------------------
def _round_down(x, m):
    return (x // m) * m


def _round_up(x, m):
    return ((x + m - 1) // m) * m


def _chip_params():
    """Returns (vmem_capacity_bytes, tensorcores_per_chip) with safe fallbacks."""
    vmem_cap = 128 * 1024 * 1024          # v5e/v6e default
    num_cores = 1
    try:
        vmem_cap = int(pltpu.get_tpu_info().vmem_capacity_bytes)
    except Exception:
        pass
    try:
        kind = jax.devices()[0].device_kind.lower()
        if "v7" in kind:
            num_cores = 2
            vmem_cap = min(vmem_cap, 64 * 1024 * 1024)
    except Exception:
        pass
    return vmem_cap, num_cores


def _choose_row_block(rows, d_pad, itemsize, vmem_cap, num_cores):
    # dtype-aware sublane alignment: 8 (f32), 16 (bf16), 32 (int8/fp8).
    sub = max(8, 32 // max(int(itemsize), 1))
    # in + out, each double-buffered -> 4 live block buffers.  Target multi-MiB
    # blocks to amortize the ~0.35 us/grid-step overhead; cap per-block budget
    # at vmem_cap/8 so v7x (64 MiB) never over-commits.
    per_block_budget = min(vmem_cap // 8, 16 * 1024 * 1024)
    bytes_per_row = d_pad * itemsize
    max_rows = max(sub, _round_down(per_block_budget // bytes_per_row, sub))
    row_block = min(rows, max_rows)
    # Never collapse to a single grid step on a multi-TC chip (v7x): keep
    # grid >= num_cores so the "parallel" row axis shards across cores.
    if num_cores > 1 and row_block >= rows and rows > sub:
        row_block = max(sub, _round_up(pl.cdiv(rows, num_cores), sub))
    if row_block < rows:
        row_block = max(sub, _round_down(row_block, sub))
    return row_block


# ------------------------------ wrapper -------------------------------------
def rms_norm(x, weight=None, eps=1e-6, use_mxu_reduce=None):
    orig_shape = x.shape
    d = orig_shape[-1]
    rows = max(1, math.prod(orig_shape[:-1]))
    x2 = x.reshape(rows, d)

    # Lane-dense feature dim: pad to a multiple of 128. Zero padding does not
    # change sum(x*x); the divisor below uses the true D.
    d_pad = _round_up(d, 128)
    if d_pad != d:
        x2 = jnp.pad(x2, ((0, 0), (0, d_pad - d)))

    vmem_cap, num_cores = _chip_params()
    if use_mxu_reduce is None:
        use_mxu_reduce = num_cores > 1        # auto-enable on v7x only

    itemsize = x2.dtype.itemsize
    row_block = _choose_row_block(rows, d_pad, itemsize, vmem_cap, num_cores)
    grid = (pl.cdiv(rows, row_block),)

    # Explicit scoped-VMEM limit (v5e default is only 16 MiB).
    block_bytes = row_block * d_pad * itemsize
    needed = 4 * block_bytes + 2 * d_pad * 4 + (1 << 20)
    vmem_limit = int(min(max(needed, 32 * 1024 * 1024), (vmem_cap * 3) // 4))

    w_bytes = d_pad * 4 if weight is not None else 0
    cost = pl.CostEstimate(
        flops=3 * rows * d_pad,
        transcendentals=rows,
        bytes_accessed=2 * rows * d_pad * itemsize + w_bytes,
    )
    cparams = pltpu.CompilerParams(
        dimension_semantics=("parallel",),
        vmem_limit_bytes=vmem_limit,
    )

    x_spec = pl.BlockSpec((row_block, d_pad), lambda i: (i, 0))
    o_spec = pl.BlockSpec((row_block, d_pad), lambda i: (i, 0))
    out_shape = jax.ShapeDtypeStruct((rows, d_pad), x.dtype)

    kker = dict(eps=float(eps), inv_d=1.0 / float(d),
                use_mxu_reduce=bool(use_mxu_reduce))

    if weight is None:
        out = pl.pallas_call(
            functools.partial(_rmsnorm_kernel, **kker),
            out_shape=out_shape,
            grid=grid,
            in_specs=[x_spec],
            out_specs=o_spec,
            compiler_params=cparams,
            cost_estimate=cost,
        )(x2)
    else:
        w2 = weight.reshape(1, d).astype(x.dtype)
        if d_pad != d:
            w2 = jnp.pad(w2, ((0, 0), (0, d_pad - d)))
        w_spec = pl.BlockSpec((1, d_pad), lambda i: (0, 0))
        out = pl.pallas_call(
            functools.partial(_rmsnorm_affine_kernel, **kker),
            out_shape=out_shape,
            grid=grid,
            in_specs=[x_spec, w_spec],
            out_specs=o_spec,
            compiler_params=cparams,
            cost_estimate=cost,
        )(x2, w2)

    if d_pad != d:
        out = out[:, :d]
    return out.reshape(orig_shape)


# -------------------------- reference (plain JAX) ---------------------------
def rms_norm_ref(x, weight=None, eps=1e-6):
    xf = x.astype(jnp.float32)
    ms = jnp.mean(xf * xf, axis=-1, keepdims=True)
    y = xf * jax.lax.rsqrt(ms + eps)
    if weight is not None:
        y = y * weight.astype(jnp.float32)
    return y.astype(x.dtype)


# --------------------------------- main -------------------------------------
if __name__ == "__main__":
    key = jax.random.PRNGKey(0)
    kx, kw, kx2 = jax.random.split(key, 3)

    # Small, lane-dense shapes: batch=2, seq=8, dim=128 (f32).
    B, S, D = 2, 8, 128
    x = jax.random.normal(kx, (B, S, D), dtype=jnp.float32)
    w = 1.0 + 0.1 * jax.random.normal(kw, (D,), dtype=jnp.float32)

    # Default module config: elementwise_affine=False.
    out = jax.block_until_ready(rms_norm(x))
    ref = rms_norm_ref(x)
    assert jnp.allclose(out, ref, atol=1e-5, rtol=1e-5), "mismatch (no affine)"

    # Affine config: elementwise_affine=True.
    out_w = jax.block_until_ready(rms_norm(x, w))
    ref_w = rms_norm_ref(x, w)
    assert jnp.allclose(out_w, ref_w, atol=1e-5, rtol=1e-5), "mismatch (affine)"

    # Narrow dtype + non-multiple-of-128 feature dim (exercises lane padding
    # and dtype-aware alignment): batch=2, seq=7, dim=96 (bf16).
    xb = jax.random.normal(kx2, (2, 7, 96), dtype=jnp.bfloat16)
    out_b = jax.block_until_ready(rms_norm(xb))
    ref_b = rms_norm_ref(xb)
    assert jnp.allclose(out_b.astype(jnp.float32), ref_b.astype(jnp.float32),
                        atol=2e-2, rtol=2e-2), "mismatch (bf16, padded D)"

    print("KERNEL_OK")
</pallas_src>

<mosaic_0001>
module attributes {stable_mosaic.version = 11 : i64} {
  func.func @_rmsnorm_kernel(%arg0: i32, %arg1: memref<16x128xf32, #tpu.memory_space<vmem>>, %arg2: memref<16x128xf32, #tpu.memory_space<vmem>>) attributes {dimension_semantics = [#tpu.dimension_semantics<parallel>], iteration_bounds = array<i64: 1>, scalar_prefetch = 0 : i64, scratch_operands = 0 : i64, tpu.core_type = #tpu.core_type<tc>, window_params = [{transform_indices = @transform_0, window_bounds = array<i64: 16, 128>}, {transform_indices = @transform_1, window_bounds = array<i64: 16, 128>}]} {
    %c0 = arith.constant 0 : index
    %c0_0 = arith.constant 0 : index
    %0 = vector.load %arg1[%c0, %c0_0] : memref<16x128xf32, #tpu.memory_space<vmem>>, vector<16x128xf32>
    %1 = arith.mulf %0, %0 : vector<16x128xf32>
    %cst = arith.constant dense<0.000000e+00> : vector<16xf32>
    %2 = vector.multi_reduction <add>, %1, %cst [1] : vector<16x128xf32> to vector<16xf32>
    %3 = vector.shape_cast %2 : vector<16xf32> to vector<16x1xf32>
    %cst_1 = arith.constant 7.812500e-03 : f32
    %4 = vector.broadcast %cst_1 : f32 to vector<16x1xf32>
    %5 = arith.mulf %3, %4 : vector<16x1xf32>
    %cst_2 = arith.constant 9.99999997E-7 : f32
    %6 = vector.broadcast %cst_2 : f32 to vector<16x1xf32>
    %7 = arith.addf %5, %6 : vector<16x1xf32>
    %8 = math.rsqrt %7 : vector<16x1xf32>
    %9 = vector.broadcast %8 : vector<16x1xf32> to vector<16x128xf32>
    %10 = arith.mulf %0, %9 : vector<16x128xf32>
    %c0_3 = arith.constant 0 : index
    %c0_4 = arith.constant 0 : index
    %11 = vector.load %arg2[%c0_3, %c0_4] : memref<16x128xf32, #tpu.memory_space<vmem>>, vector<16x128xf32>
    tpu.vector_store %arg2[%c0_3, %c0_4], %10 {strides = array<i32>} : memref<16x128xf32, #tpu.memory_space<vmem>>, vector<16x128xf32>,
    return
  }
  func.func @transform_0(%arg0: i32) -> (i32, i32) {
    %c0_i32 = arith.constant 0 : i32
    %c0_i32_0 = arith.constant 0 : i32
    return %arg0, %c0_i32 : i32, i32
  }
  func.func @transform_1(%arg0: i32) -> (i32, i32) {
    %c0_i32 = arith.constant 0 : i32
    %c0_i32_0 = arith.constant 0 : i32
    return %arg0, %c0_i32 : i32, i32
  }
}

</mosaic_0001>

<llo_original>
// kernel: tpu_custom_call.1
$region0: #{tpu_custom_call.1}
  #allocation0 [shape = 'u32[]', space=smem, size = 0x4, offset = 0x4, fixed_abs, tag = 'smem constant byte address 0x4 - core index']
  #allocation1 [shape = 'u32[72,128]{1,0:T(1,128)}', space=vmem, size = 0x9000, scoped, tag = 'internal scratch']
  %s0 = inlined_call_operand.hbm [shape: f32[16,128], index: 0, kind: input, shape index: {}]
  %s1 = inlined_call_operand.hbm [shape: f32[16,128], index: 1, kind: output, shape index: {}]
  %s2 = sld [smem:[#allocation0]]
  $region18: #{tpu_custom_call.1} parent=0
    _
  %s4 = ssub.s32 1, %s2
  %s5 = scalar_select 0, %s4, %s2
  $region1: #{tpu_custom_call.1} parent=0
    #allocation2 [shape = 'u8[8192]{0}', space=vmem, size = 0x2000, scoped, tag = 'input window, operand 0, single buffered']
    #allocation3 [shape = 's32[1]{0}', space=sflag, size = 0x4, scoped, tag = 'scoped memory for tpu_custom_call.1']
    #allocation4 [shape = 's32[1]{0}', space=sflag, size = 0x4, scoped, tag = 'scoped memory for tpu_custom_call.1']
    #allocation5 [shape = 'u8[8192]{0}', space=vmem, size = 0x2000, scoped, tag = 'output window, operand 0, single buffered']
    %6 = vsyncpa [#allocation3], 0
    %7 = vsyncpa [#allocation4], 0
    // Predicated region
    $region2: #{tpu_custom_call.1} parent=1 // pred_check
      _
    $region3: #{tpu_custom_call.1} parent=1 // pred_check_branch
      %9 = sbr.rel (0) target = $region5
    $region4: #{tpu_custom_call.1} parent=1 // pred_region
      %11 = vsyncadd [#allocation3], 0
      %s12 = sshll.u32 %s0, 4
      %s13 = int_to_ptr.hbm [resolvable:$true] %s12
      %s14 = sshll.u32 [#allocation2], 4
      %s15 = int_to_ptr.vmem [resolvable:$true] %s14
      %20 = dma.hbm_to_vmem [thread:$0]  %s13, 256, %s15, [#allocation3], 128, 128, 8
    $region5: #{tpu_custom_call.1} parent=1 // pred_fallthru
      _
    // Predicated region
    $region6: #{tpu_custom_call.1} parent=1 // pred_check
      _
    $region7: #{tpu_custom_call.1} parent=1 // pred_check_branch
      %22 = sbr.rel (0) target = $region9
    $region8: #{tpu_custom_call.1} parent=1 // pred_region
      %24 = dma.done [#allocation3], 256
    $region9: #{tpu_custom_call.1} parent=1 // pred_fallthru
      _
    %v25 = vld [vmem:[#allocation2] sm:$0xff]
    %v26 = vld [vmem:[#allocation2 + $0x8] sm:$0xff]
    %v27 = vmul.f32 %v25, %v25
    %v28 = vmul.f32 %v26, %v26
    %29 = vadd.xlane.f32.xlu0 %v27
    %v30 = vpop.xlane.xlu0 %29
    %31 = vadd.xlane.f32.xlu0 %v28
    %v32 = vpop.xlane.xlu0 %31
    %v33 = vmul.f32 %v30, 0.0078125
    %v34 = vmul.f32 %v32, 0.0078125
    %v35 = vadd.f32 %v33, 1e-06
    %v36 = vadd.f32 %v34, 1e-06
    %v37 = vrsqrt.pop %v35
    %v38 = vmul.f32 %v37, %v35
    %v39 = vmul.f32 %v38, %v37
    %v40 = vmul.f32 0.5, %v39
    %v41 = vsub.f32 1.5, %v40
    %v42 = vmul.f32 %v37, %v41
    %vm43 = vweird.f32 %v35
    %vm44 = vweird.f32 %v37
    %vm45 = vmor %vm43, %vm44
    %v46 = vsel %vm45, %v37, %v42
    %v47 = vrsqrt.pop %v36
    %v48 = vmul.f32 %v47, %v36
    %v49 = vmul.f32 %v48, %v47
    %v50 = vmul.f32 0.5, %v49
    %v51 = vsub.f32 1.5, %v50
    %v52 = vmul.f32 %v47, %v51
    %vm53 = vweird.f32 %v36
    %vm54 = vweird.f32 %v47
    %vm55 = vmor %vm53, %vm54
    %v56 = vsel %vm55, %v47, %v52
    %v57 = vmul.f32 %v25, %v46
    %v58 = vmul.f32 %v26, %v56
    %59 = vst [vmem:[#allocation5] sm:$0xff] %v57
    %60 = vst [vmem:[#allocation5 + $0x8] sm:$0xff] %v58
    // Predicated region
    $region10: #{tpu_custom_call.1} parent=1 // pred_check
      _
    $region11: #{tpu_custom_call.1} parent=1 // pred_check_branch
      %62 = sbr.rel (0) target = $region13
    $region12: #{tpu_custom_call.1} parent=1 // pred_region
      %64 = vsyncadd [#allocation4], 0
      %s65 = sshll.u32 [#allocation5], 4
      %s66 = int_to_ptr.vmem [resolvable:$true] %s65
      %s67 = sshll.u32 %s1, 4
      %s68 = int_to_ptr.hbm [resolvable:$true] %s67
      %73 = dma.vmem_to_hbm [thread:$0]  %s66, 256, %s68, [#allocation4], 128, 128, 8
    $region13: #{tpu_custom_call.1} parent=1 // pred_fallthru
      _
    // Predicated region
    $region14: #{tpu_custom_call.1} parent=1 // pred_check
      _
    $region15: #{tpu_custom_call.1} parent=1 // pred_check_branch
      %75 = sbr.rel (0) target = $region17
    $region16: #{tpu_custom_call.1} parent=1 // pred_region
      %77 = dma.done [#allocation4], 256
    $region17: #{tpu_custom_call.1} parent=1 // pred_fallthru
      _
    %78 = vsyncpa [#allocation3], 1
    %79 = vsyncpa [#allocation4], 1

</llo_original>
